<compile_context>
chip_gen: v7x
topology: tpu7x:2x2x1
jax: 0.10.0
libtpu: 0.0.40
codegen_flags: <defaults>
</compile_context>

<pallas_src>
import functools

import jax
import jax.numpy as jnp
from jax.experimental import pallas as pl
from jax.experimental.pallas import tpu as pltpu

_PAIRWISE_EPS = 1e-6          # matches torch.nn.functional.pairwise_distance default
_TARGET_BLOCK_BYTES = 1 << 20  # ~1 MiB per input block (per pipeline buffer)
_MAX_BLOCK_D = 2048            # cap lanes per block; wider D reduced across grid axis 1


def _round_up(x, m):
    return ((x + m - 1) // m) * m


def _round_down(x, m):
    return (x // m) * m


def _contrastive_kernel(x1_ref, x2_ref, o_ref, acc_ref, *,
                        margin, d_actual, block_d, mask_cols):
    k = pl.program_id(1)

    @pl.when(k == 0)
    def _():
        acc_ref[...] = jnp.zeros_like(acc_ref)

    # Elementwise diff (+eps, matching F.pairwise_distance), accumulate squared
    # sum over the feature (lane) axis in f32.
    diff = (x1_ref[...].astype(jnp.float32)
            - x2_ref[...].astype(jnp.float32)
            + _PAIRWISE_EPS)
    if mask_cols:  # static: only emitted when D was padded up to the lane tiling
        col = jax.lax.broadcasted_iota(jnp.int32, diff.shape, 1) + k * block_d
        diff = jnp.where(col < d_actual, diff, 0.0)
    acc_ref[...] += jnp.sum(diff * diff, axis=-1, keepdims=True)  # (block_rows, 1)

    @pl.when(k == pl.num_programs(1) - 1)
    def _():
        dist = jnp.sqrt(acc_ref[...])                 # euclidean distance per row
        hinge = jnp.maximum(margin - dist, 0.0)       # clamp(margin - d, min=0)
        o_ref[...] = (hinge * hinge).astype(o_ref.dtype)  # pow(., 2)


def contrastive_loss_wwn(output1, output2, margin=5.0, block_rows=None):
    """Pallas equivalent of ContrastiveLoss_wwn(margin).forward(output1, output2)."""
    assert output1.shape == output2.shape and output1.ndim == 2
    n, d = output1.shape
    itemsize = jnp.dtype(output1.dtype).itemsize
    # Sublane alignment: 8 rows for 4-byte dtypes, 16 for bf16, 32 for int8/fp8.
    row_align = max(8, 32 // max(itemsize, 1))

    # Lane (feature) tiling: pad D to a multiple of 128; very wide embeddings are
    # split across a second (reduction) grid axis so blocks stay VMEM-friendly.
    d_pad = _round_up(d, 128)
    if d_pad > _MAX_BLOCK_D:
        block_d = _MAX_BLOCK_D
        d_pad = _round_up(d, block_d)
    else:
        block_d = d_pad

    # Row tiling: target ~1 MiB per input block so the BlockSpec pipeline
    # double-buffers and the grid has many steps (megacore sharding on v7x).
    if block_rows is None:
        block_rows = _TARGET_BLOCK_BYTES // (block_d * itemsize)
    block_rows = max(row_align, _round_down(int(block_rows), row_align))
    block_rows = min(block_rows, _round_up(n, row_align))
    n_pad = _round_up(n, block_rows)

    # Pad ragged shapes. Padded rows are sliced off the result; padded columns
    # are masked out inside the kernel so they don't perturb the reduction.
    x1, x2 = output1, output2
    if n_pad != n or d_pad != d:
        pad = ((0, n_pad - n), (0, d_pad - d))
        x1 = jnp.pad(x1, pad)
        x2 = jnp.pad(x2, pad)

    grid = (n_pad // block_rows, d_pad // block_d)

    kernel = functools.partial(
        _contrastive_kernel,
        margin=float(margin),
        d_actual=d,
        block_d=block_d,
        mask_cols=(d_pad != d),
    )

    cost = pl.CostEstimate(
        flops=3 * n * d + 3 * n,
        transcendentals=n,
        bytes_accessed=2 * n * d * itemsize + n * 4,
    )

    out = pl.pallas_call(
        kernel,
        out_shape=jax.ShapeDtypeStruct((n_pad, 1), jnp.float32),
        grid=grid,
        in_specs=[
            pl.BlockSpec((block_rows, block_d), lambda i, k: (i, k)),
            pl.BlockSpec((block_rows, block_d), lambda i, k: (i, k)),
        ],
        out_specs=pl.BlockSpec((block_rows, 1), lambda i, k: (i, 0)),
        scratch_shapes=[pltpu.VMEM((block_rows, 1), jnp.float32)],
        compiler_params=pltpu.CompilerParams(
            dimension_semantics=("parallel", "arbitrary"),
        ),
        cost_estimate=cost,
    )(x1, x2)
    # TODO(synk): output stays (N, 1) lane-sparse; a lane-dense (N//128, 128) slab
    # would only matter for very small D where writes are a visible traffic fraction.
    return out[:n, 0]  # (N,) — same shape as the PyTorch module's return value


def _reference(output1, output2, margin=5.0):
    diff = output1.astype(jnp.float32) - output2.astype(jnp.float32) + _PAIRWISE_EPS
    dist = jnp.sqrt(jnp.sum(diff * diff, axis=-1))
    return jnp.maximum(margin - dist, 0.0) ** 2


if __name__ == "__main__":
    key = jax.random.PRNGKey(0)
    k1, k2, k3, k4 = jax.random.split(key, 4)

    # Small batch of D-dim embedding pairs, as the module's forward implies.
    N, D = 8, 32
    o1 = jax.random.normal(k1, (N, D), dtype=jnp.float32)
    o2 = jax.random.normal(k2, (N, D), dtype=jnp.float32)
    loss = jax.block_until_ready(contrastive_loss_wwn(o1, o2, margin=5.0))
    ref = _reference(o1, o2, margin=5.0)
    assert loss.shape == (N,)
    assert jnp.allclose(loss, ref, rtol=1e-5, atol=1e-5), (loss, ref)

    # Ragged shapes exercise the row padding + column-mask path.
    N2, D2 = 37, 200
    o1b = jax.random.normal(k3, (N2, D2), dtype=jnp.float32)
    o2b = jax.random.normal(k4, (N2, D2), dtype=jnp.float32)
    loss_b = jax.block_until_ready(contrastive_loss_wwn(o1b, o2b, margin=5.0))
    ref_b = _reference(o1b, o2b, margin=5.0)
    assert loss_b.shape == (N2,)
    assert jnp.allclose(loss_b, ref_b, rtol=1e-5, atol=1e-5), (loss_b, ref_b)

    print("KERNEL_OK")
</pallas_src>

<mosaic_0001>
module attributes {stable_mosaic.version = 11 : i64} {
  func.func @_contrastive_kernel(%arg0: i32, %arg1: i32, %arg2: memref<8x128xf32, #tpu.memory_space<vmem>>, %arg3: memref<8x128xf32, #tpu.memory_space<vmem>>, %arg4: memref<8x1xf32, #tpu.memory_space<vmem>>, %arg5: memref<8x1xf32, #tpu.memory_space<vmem>>) attributes {dimension_semantics = [#tpu.dimension_semantics<parallel>, #tpu.dimension_semantics<arbitrary>], iteration_bounds = array<i64: 1, 1>, scalar_prefetch = 0 : i64, scratch_operands = 1 : i64, tpu.core_type = #tpu.core_type<tc>, window_params = [{transform_indices = @transform_0, window_bounds = array<i64: 8, 128>}, {transform_indices = @transform_1, window_bounds = array<i64: 8, 128>}, {transform_indices = @transform_2, window_bounds = array<i64: 8, 1>}]} {
    %c0_i32 = arith.constant 0 : i32
    %0 = arith.cmpi eq, %arg1, %c0_i32 : i32
    %1 = arith.extui %0 : i1 to i32
    %c0_i32_0 = arith.constant 0 : i32
    %2 = arith.cmpi ne, %1, %c0_i32_0 : i32
    scf.if %2 {
      %cst_12 = arith.constant 0.000000e+00 : f32
      %25 = vector.broadcast %cst_12 : f32 to vector<8x1xf32>
      %c0_13 = arith.constant 0 : index
      %c0_14 = arith.constant 0 : index
      %26 = vector.load %arg5[%c0_13, %c0_14] : memref<8x1xf32, #tpu.memory_space<vmem>>, vector<8x1xf32>
      tpu.vector_store %arg5[%c0_13, %c0_14], %25 {strides = array<i32>} : memref<8x1xf32, #tpu.memory_space<vmem>>, vector<8x1xf32>,
    } else {
    }
    %c0 = arith.constant 0 : index
    %c0_1 = arith.constant 0 : index
    %3 = vector.load %arg2[%c0, %c0_1] : memref<8x128xf32, #tpu.memory_space<vmem>>, vector<8x128xf32>
    %c0_2 = arith.constant 0 : index
    %c0_3 = arith.constant 0 : index
    %4 = vector.load %arg3[%c0_2, %c0_3] : memref<8x128xf32, #tpu.memory_space<vmem>>, vector<8x128xf32>
    %5 = arith.subf %3, %4 : vector<8x128xf32>
    %cst = arith.constant 9.99999997E-7 : f32
    %6 = vector.broadcast %cst : f32 to vector<8x128xf32>
    %7 = arith.addf %5, %6 : vector<8x128xf32>
    %8 = tpu.iota {dimensions = array<i32: 1>} : vector<8x128xi32>
    %c128_i32 = arith.constant 128 : i32
    %9 = arith.muli %arg1, %c128_i32 : i32
    %10 = vector.broadcast %9 : i32 to vector<8x128xi32>
    %11 = arith.addi %8, %10 : vector<8x128xi32>
    %c32_i32 = arith.constant 32 : i32
    %12 = vector.broadcast %c32_i32 : i32 to vector<8x128xi32>
    %13 = arith.cmpi slt, %11, %12 : vector<8x128xi32>
    %cst_4 = arith.constant 0.000000e+00 : f32
    %14 = vector.broadcast %cst_4 : f32 to vector<8x128xf32>
    %15 = arith.select %13, %7, %14 : vector<8x128xi1>, vector<8x128xf32>
    %c0_5 = arith.constant 0 : index
    %c0_6 = arith.constant 0 : index
    %16 = vector.load %arg5[%c0_5, %c0_6] : memref<8x1xf32, #tpu.memory_space<vmem>>, vector<8x1xf32>
    %17 = arith.mulf %15, %15 : vector<8x128xf32>
    %cst_7 = arith.constant dense<0.000000e+00> : vector<8xf32>
    %18 = vector.multi_reduction <add>, %17, %cst_7 [1] : vector<8x128xf32> to vector<8xf32>
    %19 = vector.shape_cast %18 : vector<8xf32> to vector<8x1xf32>
    %20 = arith.addf %16, %19 : vector<8x1xf32>
    %c0_8 = arith.constant 0 : index
    %c0_9 = arith.constant 0 : index
    %21 = vector.load %arg5[%c0_8, %c0_9] : memref<8x1xf32, #tpu.memory_space<vmem>>, vector<8x1xf32>
    tpu.vector_store %arg5[%c0_8, %c0_9], %20 {strides = array<i32>} : memref<8x1xf32, #tpu.memory_space<vmem>>, vector<8x1xf32>,
    %c0_i32_10 = arith.constant 0 : i32
    %22 = arith.cmpi eq, %arg1, %c0_i32_10 : i32
    %23 = arith.extui %22 : i1 to i32
    %c0_i32_11 = arith.constant 0 : i32
    %24 = arith.cmpi ne, %23, %c0_i32_11 : i32
    scf.if %24 {
      %c0_12 = arith.constant 0 : index
      %c0_13 = arith.constant 0 : index
      %25 = vector.load %arg5[%c0_12, %c0_13] : memref<8x1xf32, #tpu.memory_space<vmem>>, vector<8x1xf32>
      %26 = math.sqrt %25 : vector<8x1xf32>
      %cst_14 = arith.constant 5.000000e+00 : f32
      %27 = vector.broadcast %cst_14 : f32 to vector<8x1xf32>
      %28 = arith.subf %27, %26 : vector<8x1xf32>
      %cst_15 = arith.constant 0.000000e+00 : f32
      %29 = vector.broadcast %cst_15 : f32 to vector<8x1xf32>
      %30 = arith.maximumf %28, %29 : vector<8x1xf32>
      %31 = arith.mulf %30, %30 : vector<8x1xf32>
      %c0_16 = arith.constant 0 : index
      %c0_17 = arith.constant 0 : index
      %32 = vector.load %arg4[%c0_16, %c0_17] : memref<8x1xf32, #tpu.memory_space<vmem>>, vector<8x1xf32>
      tpu.vector_store %arg4[%c0_16, %c0_17], %31 {strides = array<i32>} : memref<8x1xf32, #tpu.memory_space<vmem>>, vector<8x1xf32>,
    } else {
    }
    return
  }
  func.func @transform_0(%arg0: i32, %arg1: i32) -> (i32, i32) {
    %c0_i32 = arith.constant 0 : i32
    return %arg0, %arg1 : i32, i32
  }
  func.func @transform_1(%arg0: i32, %arg1: i32) -> (i32, i32) {
    %c0_i32 = arith.constant 0 : i32
    return %arg0, %arg1 : i32, i32
  }
  func.func @transform_2(%arg0: i32, %arg1: i32) -> (i32, i32) {
    %c0_i32 = arith.constant 0 : i32
    %c0_i32_0 = arith.constant 0 : i32
    return %arg0, %c0_i32 : i32, i32
  }
}

</mosaic_0001>

<llo_original>
// kernel: tpu_custom_call.1
$region0: #{tpu_custom_call.1}
  #allocation0 [shape = 'u32[]', space=smem, size = 0x4, offset = 0x4, fixed_abs, tag = 'smem constant byte address 0x4 - core index']
  #allocation1 [shape = 'u32[144,128]{1,0:T(1,128)}', space=vmem, size = 0x12000, scoped, tag = 'internal scratch']
  #allocation2 [shape = 'f32[8,1]{1,0:T(8,128)}', space=vmem, size = 0x1000, scoped, tag = 'scratch operand']
  %s0 = inlined_call_operand.hbm [shape: f32[8,128], index: 0, kind: input, shape index: {}]
  %s1 = inlined_call_operand.hbm [shape: f32[8,128], index: 1, kind: input, shape index: {}]
  %s2 = inlined_call_operand.vmem [shape: f32[8,1], index: 2, kind: output, shape index: {}]
  %s3 = sld [smem:[#allocation0]]
  $region34: #{tpu_custom_call.1} parent=0
    _
  %s5 = ssub.s32 1, %s3
  %s6 = scalar_select 0, %s5, %s3
  $region1: #{tpu_custom_call.1} parent=0
    #allocation3 [shape = 'u8[4096]{0}', space=vmem, size = 0x1000, scoped, tag = 'input window, operand 0, single buffered']
    #allocation4 [shape = 's32[1]{0}', space=sflag, size = 0x4, scoped, tag = 'scoped memory for tpu_custom_call.1']
    #allocation5 [shape = 'u8[4096]{0}', space=vmem, size = 0x1000, scoped, tag = 'input window, operand 1, single buffered']
    #allocation6 [shape = 's32[1]{0}', space=sflag, size = 0x4, scoped, tag = 'scoped memory for tpu_custom_call.1']
    %7 = vsyncpa [#allocation4], 0
    %8 = vsyncpa [#allocation6], 0
    // Predicated region
    $region2: #{tpu_custom_call.1} parent=1 // pred_check
      _
    $region3: #{tpu_custom_call.1} parent=1 // pred_check_branch
      %10 = sbr.rel (0) target = $region5
    $region4: #{tpu_custom_call.1} parent=1 // pred_region
      %s12 = ssub.s32 128, 128
      %13 = vsyncadd [#allocation4], %s12
      %s15 = sshll.u32 [#allocation3], 4
      %s16 = int_to_ptr.vmem [resolvable:$true] %s15
      %18 = dma.hbm_to_vmem [thread:$0]  %s0, 128, %s16, [#allocation4]
    $region5: #{tpu_custom_call.1} parent=1 // pred_fallthru
      _
    // Predicated region
    $region6: #{tpu_custom_call.1} parent=1 // pred_check
      _
    $region7: #{tpu_custom_call.1} parent=1 // pred_check_branch
      %20 = sbr.rel (0) target = $region9
    $region8: #{tpu_custom_call.1} parent=1 // pred_region
      %s22 = ssub.s32 128, 128
      %23 = vsyncadd [#allocation6], %s22
      %s25 = sshll.u32 [#allocation5], 4
      %s26 = int_to_ptr.vmem [resolvable:$true] %s25
      %28 = dma.hbm_to_vmem [thread:$0]  %s1, 128, %s26, [#allocation6]
    $region9: #{tpu_custom_call.1} parent=1 // pred_fallthru
      _
    // Predicated region
    $region10: #{tpu_custom_call.1} parent=1 // pred_check
      _
    $region11: #{tpu_custom_call.1} parent=1 // pred_check_branch
      %30 = sbr.rel (0) target = $region13
    $region12: #{tpu_custom_call.1} parent=1 // pred_region
      %31 = dma.done [#allocation4], 128
    $region13: #{tpu_custom_call.1} parent=1 // pred_fallthru
      _
    // Predicated region
    $region14: #{tpu_custom_call.1} parent=1 // pred_check
      _
    $region15: #{tpu_custom_call.1} parent=1 // pred_check_branch
      %33 = sbr.rel (0) target = $region17
    $region16: #{tpu_custom_call.1} parent=1 // pred_region
      %34 = dma.done [#allocation6], 128
    $region17: #{tpu_custom_call.1} parent=1 // pred_fallthru
      _
    %p35 = scmp.eq.s32.totalorder 0, 0
    // Predicated region
    $region18: #{tpu_custom_call.1} parent=1 // pred_check
      %p36 = pneg %p35
    $region19: #{tpu_custom_call.1} parent=1 // pred_check_branch
      %38 = sbr.rel (%p36) target = $region21
    $region20: #{tpu_custom_call.1} parent=1 // pred_region
      %vm39 = vcmask 7168
      %40 = vst.msk [vmem:[#allocation2] sm:$0xff] %vm39, 0.0
    $region21: #{tpu_custom_call.1} parent=1 // pred_fallthru
      _
    %v41 = vld [vmem:[#allocation3] sm:$0xff]
    %v42 = vld [vmem:[#allocation5] sm:$0xff]
    %v43 = vsub.f32 %v41, %v42
    %v44 = vadd.f32 %v43, 1e-06
    %v45 = vlaneseq
    %v46 = vand.u32 %v45, 127
    %s47 = smul.u32 0, 128
    %v48 = vstv %s47
    %v49 = vadd.s32 %v46, %v48
    %vm50 = vcmp.lt.s32.totalorder %v49, 32
    %v51 = vsel %vm50, %v44, 0.0
    %v52 = vld [vmem:[#allocation2] sm:$0xff]
    %v53 = vmul.f32 %v51, %v51
    %54 = vadd.xlane.f32.xlu0 %v53
    %v55 = vpop.xlane.xlu0 %54
    %v56 = vadd.f32 %v52, %v55
    %vm57 = vcmask 7168
    %58 = vst.msk [vmem:[#allocation2] sm:$0xff] %vm57, %v56
    // Predicated region
    $region22: #{tpu_custom_call.1} parent=1 // pred_check
      %p59 = pneg %p35
    $region23: #{tpu_custom_call.1} parent=1 // pred_check_branch
      %61 = sbr.rel (%p59) target = $region25
    $region24: #{tpu_custom_call.1} parent=1 // pred_region
      %v62 = vld [vmem:[#allocation2] sm:$0xff]
      %v63 = vrsqrt.pop %v62
      %v64 = vmul.f32 %v62, %v63
      %vm65 = vcmp.eq.f32.partialorder %v62, inf
      %v66 = vsel %vm65, %v62, %v64
      %vm67 = vcmp.eq.f32.partialorder %v62, 0.0
      %v68 = vand.u32 %v62, 2147483648
      %v69 = vsel %vm67, %v68, %v66
      %v70 = vsub.f32 5.0, %v69
      %v71 = vmax.f32 %v70, 0.0
      %v72 = vmul.f32 %v71, %v71
      %73 = vst.msk [vmem:[%s2] sm:$0xff] %vm57, %v72
    $region25: #{tpu_custom_call.1} parent=1 // pred_fallthru
      _
    // Predicated region
    $region26: #{tpu_custom_call.1} parent=1 // pred_check
      _
    $region27: #{tpu_custom_call.1} parent=1 // pred_check_branch
      %75 = sbr.rel (0) target = $region29
    $region28: #{tpu_custom_call.1} parent=1 // pred_region
      _
    $region29: #{tpu_custom_call.1} parent=1 // pred_fallthru
      _
    // Predicated region
    $region30: #{tpu_custom_call.1} parent=1 // pred_check
      _
    $region31: #{tpu_custom_call.1} parent=1 // pred_check_branch
      %77 = sbr.rel (0) target = $region33
    $region32: #{tpu_custom_call.1} parent=1 // pred_region
      _
    $region33: #{tpu_custom_call.1} parent=1 // pred_fallthru
      _
    %78 = vsyncpa [#allocation4], 1
    %79 = vsyncpa [#allocation6], 1

</llo_original>
